<compile_context>
chip_gen: v7x
topology: tpu7x:2x2x1
jax: 0.10.0
libtpu: 0.0.40
codegen_flags: <defaults>
</compile_context>

<pallas_src>
import jax
import jax.numpy as jnp
from jax import lax
from jax.experimental import pallas as pl
from jax.experimental.pallas import tpu as pltpu


def _round_up(x, m):
    return ((x + m - 1) // m) * m


def attention_kernel(len_ref, x_ref, enc_ref, wlin_ref, blin_ref, watt_ref,
                     out_ref, att_ref):
    # len_ref : (TB, 1) int32   sequence lengths for this batch block
    # x_ref   : (TB, S, H)      enc_sent_com_attent block (S is padded to %8)
    # enc_ref : (TB, S, D)      enc_sents block
    # wlin_ref: (H, A), blin_ref: (1, A), watt_ref: (1, A)   (VMEM-resident)
    # out_ref : (TB, D), att_ref: (TB, S)
    TB, S, H = x_ref.shape
    A = wlin_ref.shape[1]

    # One big GEMM per grid step: [TB*S, H] @ [H, A] on the MXU (f32 acc),
    # tanh on the VPU/EUP. S%8==0 so the reshape is a zero-cost relabel.
    x2 = x_ref[...].reshape(TB * S, H)
    emb = jnp.tanh(
        jnp.dot(x2, wlin_ref[...], preferred_element_type=jnp.float32)
        + blin_ref[...].astype(jnp.float32)
    )                                                        # (TB*S, A) f32

    # Attention logits, lane-dense (TB, S): lane-reduce of emb * w_att.
    att = jnp.sum(
        emb.reshape(TB, S, A) * watt_ref[...].astype(jnp.float32), axis=-1
    )                                                        # (TB, S) f32

    # Masked softmax over S (exactly exp(att)*mask / (sum + 1e-4), stabilized).
    lens = len_ref[...]                                      # (TB, 1) int32
    idx = lax.broadcasted_iota(jnp.int32, (TB, S), 1)
    mask = idx < lens                                        # (TB, S) bool
    m = jnp.max(jnp.where(mask, att, -jnp.inf), axis=-1, keepdims=True)
    m = jnp.maximum(m, 0.0)                                  # exactness-preserving shift
    e = jnp.where(mask, jnp.exp(att - m), 0.0)               # (TB, S)
    denom = jnp.sum(e, axis=-1, keepdims=True) + 1e-4 * jnp.exp(-m)
    soft = e / denom                                         # (TB, S)
    att_ref[...] = soft.astype(att_ref.dtype)

    # Attended sum over S.
    enc = enc_ref[...].astype(jnp.float32)                   # (TB, S, D) f32
    if S <= 128:
        # Small S: VPU broadcast-multiply + sublane reduce — avoids TB tiny
        # (1,S)@(S,D) MXU pushes that serialize on the vmatmul slot.
        out = jnp.sum(soft[:, :, None] * enc, axis=1)        # (TB, D)
    else:
        # Large S: batched matmul on the MXU.
        out = jnp.einsum('bqs,bsd->bqd', soft[:, None, :], enc,
                         preferred_element_type=jnp.float32)[:, 0, :]
    out_ref[...] = out.astype(out_ref.dtype)
    # TODO(synk): if profiling shows exposed sub-128-lane stores (S, D < 128),
    # present a transposed / concatenated lane-dense output slab instead.


def _tpu_kind():
    try:
        return jax.devices()[0].device_kind.lower()
    except Exception:
        return ""


def _vmem_budget_bytes(kind):
    # v7x: 64 MiB physical VMEM per TensorCore -> ~40 MiB scoped budget.
    # v5e/v6e: 128 MiB physical -> 64 MiB scoped budget.
    if "v7" in kind:
        return 40 * 1024 * 1024
    return 64 * 1024 * 1024


def _pick_block_b(B, S_pad, H, D, vmem_budget, want_two_steps):
    """Per-step batch block size TB (always a multiple of 8, >= 8)."""
    Hp = _round_up(H, 128)          # lane padding of last dims in VMEM
    Dp = _round_up(D, 128)
    Sl = _round_up(S_pad, 128)      # att output lane padding
    B8 = _round_up(B, 8)

    # Target ~1024 GEMM rows per grid step (HBM/overhead-bound kernel).
    tb = _round_up(max(8, 1024 // max(S_pad, 1)), 8)
    tb = min(tb, B8)

    # v7x only (2 TensorCores): prefer >= 2 grid steps so both cores get work,
    # but never push TB below 8. Single-TC v5e/v6e: no clamp (serial grid).
    if want_two_steps and B8 >= 16:
        tb = min(tb, _round_up(-(-B8 // 2), 8))

    def blocks_bytes(tb):
        itemsize = 4  # conservative (f32); bf16 inputs only shrink this
        blk_in = itemsize * tb * S_pad * (Hp + Dp)           # x + enc blocks
        blk_out = 4 * tb * (Dp + Sl)                         # out + att blocks
        blk_len = 4 * _round_up(tb, 8) * 128                 # lens block
        weights = 4 * (_round_up(H, 8) * 128 + 2 * 8 * 128)  # W_lin, b_lin, w_att
        # Everything is double-buffered by the BlockSpec pipeline.
        return 2 * (blk_in + blk_out + blk_len + weights)

    # ~25% headroom for intermediates (emb, soft, etc.).
    while tb > 8 and blocks_bytes(tb) > 0.75 * vmem_budget:
        tb -= 8
    return max(tb, 8)


def attention_forward(enc_sents, enc_sent_com_attent, len_s,
                      w_lin, b_lin, w_att, *, block_b=None,
                      compute_dtype=jnp.float32):
    """enc_sents: [B,S,D], enc_sent_com_attent: [B,S,H], len_s: [B] int.
    w_lin: [H,A], b_lin: [1,A], w_att: [1,A].
    Returns (out [B,D] f32, att_soft [B,S] f32)."""
    B, S, D = enc_sents.shape
    H = enc_sent_com_attent.shape[-1]
    A = w_lin.shape[-1]

    kind = _tpu_kind()
    vmem_budget = _vmem_budget_bytes(kind)
    want_two_steps = "v7" in kind

    S_pad = _round_up(S, 8)
    if block_b is not None:
        TB = max(8, _round_up(block_b, 8))
    else:
        TB = _pick_block_b(B, S_pad, H, D, vmem_budget, want_two_steps)
    B_pad = _round_up(B, TB)

    # Pad batch (len=0 rows -> soft=0, out=0) and sequence (masked via len_s).
    if B_pad != B or S_pad != S:
        enc_sents = jnp.pad(
            enc_sents, ((0, B_pad - B), (0, S_pad - S), (0, 0)))
        enc_sent_com_attent = jnp.pad(
            enc_sent_com_attent, ((0, B_pad - B), (0, S_pad - S), (0, 0)))
        len_s = jnp.pad(len_s, (0, B_pad - B))
    lens2 = len_s.astype(jnp.int32).reshape(B_pad, 1)

    # Optional bf16 inputs (halves DMA bytes); accumulation/softmax stay f32.
    if compute_dtype != jnp.float32:
        enc_sents = enc_sents.astype(compute_dtype)
        enc_sent_com_attent = enc_sent_com_attent.astype(compute_dtype)
        w_lin = w_lin.astype(compute_dtype)

    out, att = pl.pallas_call(
        attention_kernel,
        out_shape=(
            jax.ShapeDtypeStruct((B_pad, D), jnp.float32),      # attended sum
            jax.ShapeDtypeStruct((B_pad, S_pad), jnp.float32),  # softmax weights
        ),
        grid=(B_pad // TB,),
        in_specs=[
            pl.BlockSpec((TB, 1), lambda i: (i, 0)),             # len_s block
            pl.BlockSpec((TB, S_pad, H), lambda i: (i, 0, 0)),   # enc_sent_com_attent
            pl.BlockSpec((TB, S_pad, D), lambda i: (i, 0, 0)),   # enc_sents
            pl.BlockSpec((H, A), lambda i: (0, 0)),              # W_lin (resident)
            pl.BlockSpec((1, A), lambda i: (0, 0)),              # b_lin (resident)
            pl.BlockSpec((1, A), lambda i: (0, 0)),              # w_att (resident)
        ],
        out_specs=(
            pl.BlockSpec((TB, D), lambda i: (i, 0)),
            pl.BlockSpec((TB, S_pad), lambda i: (i, 0)),
        ),
        compiler_params=pltpu.CompilerParams(
            dimension_semantics=("parallel",),
            vmem_limit_bytes=vmem_budget),
    )(lens2, enc_sent_com_attent, enc_sents, w_lin, b_lin, w_att)

    if B_pad != B or S_pad != S:
        out = out[:B]
        att = att[:B, :S]
    return out, att


def reference_forward(enc_sents, x, len_s, w_lin, b_lin, w_att):
    """Pure-JAX reference mirroring the PyTorch forward."""
    emb = jnp.tanh(x @ w_lin + b_lin)                         # (B,S,A)
    att = jnp.einsum("bsa,a->bs", emb, w_att[0])              # (B,S)
    S = x.shape[1]
    mask = (jnp.arange(S)[None, :] < len_s[:, None]).astype(jnp.float32)
    e = jnp.exp(att) * mask
    soft = e / (jnp.sum(e, axis=1, keepdims=True) + 1e-4)
    out = jnp.sum(soft[..., None] * enc_sents, axis=1)
    return out, soft


if __name__ == "__main__":
    # Small shapes consistent with the module: batch=2, seq=8, hid=32, att=16.
    B, S, HID, ATT = 2, 8, 32, 16
    D = HID   # enc_sents feature dim

    key = jax.random.PRNGKey(0)
    k1, k2, k3, k4, k5 = jax.random.split(key, 5)

    enc_sents = jax.random.normal(k1, (B, S, D), dtype=jnp.float32)
    enc_sent_com_attent = jax.random.normal(k2, (B, S, HID), dtype=jnp.float32)
    # S must equal int(len_s.max()) (same assumption as the PyTorch masked softmax).
    len_s = jnp.array([S, 5], dtype=jnp.int32)

    # Deterministic Xavier-uniform parameter init (nn.Linear shapes, stored [in,out]).
    lim_lin = (6.0 / (HID + ATT)) ** 0.5
    w_lin = jax.random.uniform(k3, (HID, ATT), jnp.float32, -lim_lin, lim_lin)
    b_lim = 1.0 / (HID ** 0.5)
    b_lin = jax.random.uniform(k4, (1, ATT), jnp.float32, -b_lim, b_lim)
    lim_att = (6.0 / (ATT + 1)) ** 0.5
    w_att = jax.random.uniform(k5, (1, ATT), jnp.float32, -lim_att, lim_att)

    out, att_soft = attention_forward(enc_sents, enc_sent_com_attent, len_s,
                                      w_lin, b_lin, w_att)
    jax.block_until_ready((out, att_soft))

    ref_out, ref_att = reference_forward(enc_sents, enc_sent_com_attent, len_s,
                                         w_lin, b_lin, w_att)
    assert out.shape == (B, D) and att_soft.shape == (B, S)
    assert jnp.allclose(out, ref_out, atol=2e-5, rtol=2e-5)
    assert jnp.allclose(att_soft, ref_att, atol=2e-5, rtol=2e-5)

    print("KERNEL_OK")
</pallas_src>

<mosaic_0001>
module attributes {stable_mosaic.version = 11 : i64} {
  func.func @attention_kernel(%arg0: i32, %arg1: memref<8x1xi32, #tpu.memory_space<vmem>>, %arg2: memref<8x8x32xf32, #tpu.memory_space<vmem>>, %arg3: memref<8x8x32xf32, #tpu.memory_space<vmem>>, %arg4: memref<32x16xf32, #tpu.memory_space<vmem>>, %arg5: memref<1x16xf32, #tpu.memory_space<vmem>>, %arg6: memref<1x16xf32, #tpu.memory_space<vmem>>, %arg7: memref<8x32xf32, #tpu.memory_space<vmem>>, %arg8: memref<8x8xf32, #tpu.memory_space<vmem>>) attributes {dimension_semantics = [#tpu.dimension_semantics<parallel>], iteration_bounds = array<i64: 1>, scalar_prefetch = 0 : i64, scratch_operands = 0 : i64, tpu.core_type = #tpu.core_type<tc>, window_params = [{transform_indices = @transform_0, window_bounds = array<i64: 8, 1>}, {transform_indices = @transform_1, window_bounds = array<i64: 8, 8, 32>}, {transform_indices = @transform_2, window_bounds = array<i64: 8, 8, 32>}, {pipeline_mode = #tpu.pipeline_mode<synchronous>, transform_indices = @transform_3, window_bounds = array<i64: 32, 16>}, {pipeline_mode = #tpu.pipeline_mode<synchronous>, transform_indices = @transform_4, window_bounds = array<i64: 1, 16>}, {pipeline_mode = #tpu.pipeline_mode<synchronous>, transform_indices = @transform_5, window_bounds = array<i64: 1, 16>}, {transform_indices = @transform_6, window_bounds = array<i64: 8, 32>}, {transform_indices = @transform_7, window_bounds = array<i64: 8, 8>}]} {
    %c0 = arith.constant 0 : index
    %c0_0 = arith.constant 0 : index
    %c0_1 = arith.constant 0 : index
    %0 = vector.load %arg2[%c0, %c0_0, %c0_1] : memref<8x8x32xf32, #tpu.memory_space<vmem>>, vector<8x8x32xf32>
    %1 = vector.shape_cast %0 : vector<8x8x32xf32> to vector<64x32xf32>
    %c0_2 = arith.constant 0 : index
    %c0_3 = arith.constant 0 : index
    %2 = vector.load %arg4[%c0_2, %c0_3] : memref<32x16xf32, #tpu.memory_space<vmem>>, vector<32x16xf32>
    %cst = arith.constant dense<0.000000e+00> : vector<64x16xf32>
    %3 = tpu.matmul %1, %2, %cst {dimension_numbers = #tpu.dot_dimension_numbers<[1], [0], [0], [1], [0, 0, 1, 1], [], []>} : vector<64x32xf32>, vector<32x16xf32>, vector<64x16xf32> -> vector<64x16xf32>
    %c0_4 = arith.constant 0 : index
    %c0_5 = arith.constant 0 : index
    %4 = vector.load %arg5[%c0_4, %c0_5] : memref<1x16xf32, #tpu.memory_space<vmem>>, vector<1x16xf32>
    %5 = vector.broadcast %4 : vector<1x16xf32> to vector<64x16xf32>
    %6 = arith.addf %3, %5 : vector<64x16xf32>
    %7 = math.tanh %6 : vector<64x16xf32>
    %8 = vector.shape_cast %7 : vector<64x16xf32> to vector<8x8x16xf32>
    %c0_6 = arith.constant 0 : index
    %c0_7 = arith.constant 0 : index
    %9 = vector.load %arg6[%c0_6, %c0_7] : memref<1x16xf32, #tpu.memory_space<vmem>>, vector<1x16xf32>
    %10 = vector.shape_cast %9 : vector<1x16xf32> to vector<1x1x16xf32>
    %11 = vector.broadcast %10 : vector<1x1x16xf32> to vector<8x8x16xf32>
    %12 = arith.mulf %8, %11 : vector<8x8x16xf32>
    %cst_8 = arith.constant dense<0.000000e+00> : vector<8x8xf32>
    %13 = vector.multi_reduction <add>, %12, %cst_8 [2] : vector<8x8x16xf32> to vector<8x8xf32>
    %c0_9 = arith.constant 0 : index
    %c0_10 = arith.constant 0 : index
    %14 = vector.load %arg1[%c0_9, %c0_10] : memref<8x1xi32, #tpu.memory_space<vmem>>, vector<8x1xi32>
    %15 = tpu.iota {dimensions = array<i32: 1>} : vector<8x8xi32>
    %16 = vector.broadcast %14 : vector<8x1xi32> to vector<8x8xi32>
    %17 = arith.cmpi slt, %15, %16 : vector<8x8xi32>
    %cst_11 = arith.constant 0xFF800000 : f32
    %18 = vector.broadcast %cst_11 : f32 to vector<8x8xf32>
    %19 = arith.select %17, %13, %18 : vector<8x8xi1>, vector<8x8xf32>
    %cst_12 = arith.constant dense<0xFF800000> : vector<8xf32>
    %20 = vector.multi_reduction <maximumf>, %19, %cst_12 [1] : vector<8x8xf32> to vector<8xf32>
    %21 = vector.shape_cast %20 : vector<8xf32> to vector<8x1xf32>
    %cst_13 = arith.constant 0.000000e+00 : f32
    %22 = vector.broadcast %cst_13 : f32 to vector<8x1xf32>
    %23 = arith.maximumf %21, %22 : vector<8x1xf32>
    %24 = vector.broadcast %23 : vector<8x1xf32> to vector<8x8xf32>
    %25 = arith.subf %13, %24 : vector<8x8xf32>
    %26 = math.exp %25 : vector<8x8xf32>
    %cst_14 = arith.constant 0.000000e+00 : f32
    %27 = vector.broadcast %cst_14 : f32 to vector<8x8xf32>
    %28 = arith.select %17, %26, %27 : vector<8x8xi1>, vector<8x8xf32>
    %cst_15 = arith.constant dense<0.000000e+00> : vector<8xf32>
    %29 = vector.multi_reduction <add>, %28, %cst_15 [1] : vector<8x8xf32> to vector<8xf32>
    %30 = vector.shape_cast %29 : vector<8xf32> to vector<8x1xf32>
    %cst_16 = arith.constant 0.000000e+00 : f32
    %31 = vector.broadcast %cst_16 : f32 to vector<8x1xf32>
    %32 = arith.subf %31, %23 : vector<8x1xf32>
    %33 = math.exp %32 : vector<8x1xf32>
    %cst_17 = arith.constant 9.99999974E-5 : f32
    %34 = vector.broadcast %cst_17 : f32 to vector<8x1xf32>
    %35 = arith.mulf %34, %33 : vector<8x1xf32>
    %36 = arith.addf %30, %35 : vector<8x1xf32>
    %37 = vector.broadcast %36 : vector<8x1xf32> to vector<8x8xf32>
    %38 = arith.divf %28, %37 : vector<8x8xf32>
    %c0_18 = arith.constant 0 : index
    %c0_19 = arith.constant 0 : index
    %39 = vector.load %arg8[%c0_18, %c0_19] : memref<8x8xf32, #tpu.memory_space<vmem>>, vector<8x8xf32>
    tpu.vector_store %arg8[%c0_18, %c0_19], %38 {strides = array<i32>} : memref<8x8xf32, #tpu.memory_space<vmem>>, vector<8x8xf32>,
    %c0_20 = arith.constant 0 : index
    %c0_21 = arith.constant 0 : index
    %c0_22 = arith.constant 0 : index
    %40 = vector.load %arg3[%c0_20, %c0_21, %c0_22] : memref<8x8x32xf32, #tpu.memory_space<vmem>>, vector<8x8x32xf32>
    %41 = vector.shape_cast %38 : vector<8x8xf32> to vector<8x8x1xf32>
    %42 = vector.broadcast %41 : vector<8x8x1xf32> to vector<8x8x32xf32>
    %43 = arith.mulf %42, %40 : vector<8x8x32xf32>
    %cst_23 = arith.constant dense<0.000000e+00> : vector<8x32xf32>
    %44 = vector.multi_reduction <add>, %43, %cst_23 [1] : vector<8x8x32xf32> to vector<8x32xf32>
    %c0_24 = arith.constant 0 : index
    %c0_25 = arith.constant 0 : index
    %45 = vector.load %arg7[%c0_24, %c0_25] : memref<8x32xf32, #tpu.memory_space<vmem>>, vector<8x32xf32>
    tpu.vector_store %arg7[%c0_24, %c0_25], %44 {strides = array<i32>} : memref<8x32xf32, #tpu.memory_space<vmem>>, vector<8x32xf32>,
    return
  }
  func.func @transform_0(%arg0: i32) -> (i32, i32) {
    %c0_i32 = arith.constant 0 : i32
    %c0_i32_0 = arith.constant 0 : i32
    return %arg0, %c0_i32 : i32, i32
  }
  func.func @transform_1(%arg0: i32) -> (i32, i32, i32) {
    %c0_i32 = arith.constant 0 : i32
    %c0_i32_0 = arith.constant 0 : i32
    %c0_i32_1 = arith.constant 0 : i32
    return %arg0, %c0_i32, %c0_i32_0 : i32, i32, i32
  }
  func.func @transform_2(%arg0: i32) -> (i32, i32, i32) {
    %c0_i32 = arith.constant 0 : i32
    %c0_i32_0 = arith.constant 0 : i32
    %c0_i32_1 = arith.constant 0 : i32
    return %arg0, %c0_i32, %c0_i32_0 : i32, i32, i32
  }
  func.func @transform_3(%arg0: i32) -> (i32, i32) {
    %c0_i32 = arith.constant 0 : i32
    %c0_i32_0 = arith.constant 0 : i32
    %c0_i32_1 = arith.constant 0 : i32
    return %c0_i32, %c0_i32_0 : i32, i32
  }
  func.func @transform_4(%arg0: i32) -> (i32, i32) {
    %c0_i32 = arith.constant 0 : i32
    %c0_i32_0 = arith.constant 0 : i32
    %c0_i32_1 = arith.constant 0 : i32
    return %c0_i32, %c0_i32_0 : i32, i32
  }
  func.func @transform_5(%arg0: i32) -> (i32, i32) {
    %c0_i32 = arith.constant 0 : i32
    %c0_i32_0 = arith.constant 0 : i32
    %c0_i32_1 = arith.constant 0 : i32
    return %c0_i32, %c0_i32_0 : i32, i32
  }
  func.func @transform_6(%arg0: i32) -> (i32, i32) {
    %c0_i32 = arith.constant 0 : i32
    %c0_i32_0 = arith.constant 0 : i32
    return %arg0, %c0_i32 : i32, i32
  }
  func.func @transform_7(%arg0: i32) -> (i32, i32) {
    %c0_i32 = arith.constant 0 : i32
    %c0_i32_0 = arith.constant 0 : i32
    return %arg0, %c0_i32 : i32, i32
  }
}

</mosaic_0001>

<llo_original>
// kernel: tpu_custom_call.1
$region0: #{tpu_custom_call.1}
  #allocation0 [shape = 'u32[]', space=smem, size = 0x4, offset = 0x4, fixed_abs, tag = 'smem constant byte address 0x4 - core index']
  #allocation1 [shape = 'u32[144,128]{1,0:T(1,128)}', space=vmem, size = 0x12000, scoped, tag = 'internal scratch']
  %s0 = inlined_call_operand.hbm [shape: s32[8,1], index: 0, kind: input, shape index: {}]
  %s1 = inlined_call_operand.hbm [shape: f32[8,8,32], index: 1, kind: input, shape index: {}]
  %s2 = inlined_call_operand.hbm [shape: f32[8,8,32], index: 2, kind: input, shape index: {}]
  %s3 = inlined_call_operand.hbm [shape: f32[32,16], index: 3, kind: input, shape index: {}]
  %s4 = inlined_call_operand.hbm [shape: f32[1,16], index: 4, kind: input, shape index: {}]
  %s5 = inlined_call_operand.hbm [shape: f32[1,16], index: 5, kind: input, shape index: {}]
  %s6 = inlined_call_operand.hbm [shape: f32[8,32], index: 6, kind: output, shape index: {0}]
  %s7 = inlined_call_operand.hbm [shape: f32[8,8], index: 7, kind: output, shape index: {1}]
  %8 = xla_tuple %s6, %s7
  %s9 = sld [smem:[#allocation0]]
  $region66: #{tpu_custom_call.1} parent=0
    _
  %s11 = ssub.s32 1, %s9
  %s12 = scalar_select 0, %s11, %s9
  $region1: #{tpu_custom_call.1} parent=0
    #allocation2 [shape = 'u8[4096]{0}', space=vmem, size = 0x1000, scoped, tag = 'input window, operand 0, single buffered']
    #allocation3 [shape = 's32[1]{0}', space=sflag, size = 0x4, scoped, tag = 'scoped memory for tpu_custom_call.1']
    #allocation4 [shape = 's32[1]{0}', space=sflag, size = 0x4, scoped, tag = 'scoped memory for tpu_custom_call.1']
    #allocation5 [shape = 'u8[32768]{0}', space=vmem, size = 0x8000, scoped, tag = 'input window, operand 1, single buffered']
    #allocation6 [shape = 's32[1]{0}', space=sflag, size = 0x4, scoped, tag = 'scoped memory for tpu_custom_call.1']
    #allocation7 [shape = 'u8[32768]{0}', space=vmem, size = 0x8000, scoped, tag = 'input window, operand 2, single buffered']
    #allocation8 [shape = 'u8[16384]{0}', space=vmem, size = 0x4000, scoped, tag = 'input window, operand 3, single buffered']
    #allocation9 [shape = 's32[1]{0}', space=sflag, size = 0x4, scoped, tag = 'scoped memory for tpu_custom_call.1']
    #allocation10 [shape = 'u8[512]{0}', space=vmem, size = 0x400, scoped, tag = 'input window, operand 4, single buffered']
    #allocation11 [shape = 'u8[512]{0}', space=vmem, size = 0x400, scoped, tag = 'input window, operand 5, single buffered']
    #allocation12 [shape = 's32[1]{0}', space=sflag, size = 0x4, scoped, tag = 'scoped memory for tpu_custom_call.1']
    #allocation13 [shape = 'u8[4096]{0}', space=vmem, size = 0x1000, scoped, tag = 'output window, operand 0, single buffered']
    #allocation14 [shape = 'u8[4096]{0}', space=vmem, size = 0x1000, scoped, tag = 'output window, operand 1, single buffered']
    #allocation15 [shape = 's32[1]{0}', space=sflag, size = 0x4, scoped, tag = 'scoped memory for tpu_custom_call.1']
    %13 = vsyncpa [#allocation3], 0
    %14 = vsyncpa [#allocation6], 0
    %15 = vsyncpa [#allocation9], 0
    %16 = vsyncpa [#allocation12], 0
    %17 = vsyncpa [#allocation4], 0
    %18 = vsyncpa [#allocation15], 0
    // Predicated region
    $region2: #{tpu_custom_call.1} parent=1 // pred_check
      _
    $region3: #{tpu_custom_call.1} parent=1 // pred_check_branch
      %20 = sbr.rel (0) target = $region5
    $region4: #{tpu_custom_call.1} parent=1 // pred_region
      %s22 = ssub.s32 128, 128
      %23 = vsyncadd [#allocation3], %s22
      %s25 = sshll.u32 [#allocation2], 4
      %s26 = int_to_ptr.vmem [resolvable:$true] %s25
      %28 = dma.hbm_to_vmem [thread:$0]  %s0, 128, %s26, [#allocation3]
    $region5: #{tpu_custom_call.1} parent=1 // pred_fallthru
      _
    // Predicated region
    $region6: #{tpu_custom_call.1} parent=1 // pred_check
      _
    $region7: #{tpu_custom_call.1} parent=1 // pred_check_branch
      %30 = sbr.rel (0) target = $region9
    $region8: #{tpu_custom_call.1} parent=1 // pred_region
      %s32 = ssub.s32 1024, 1024
      %33 = vsyncadd [#allocation6], %s32
      %s34 = sshll.u32 [#allocation5], 4
      %s35 = int_to_ptr.vmem [resolvable:$true] %s34
      %40 = dma.hbm_to_vmem [thread:$0]  %s1, 1024, %s35, [#allocation6], 128, 128, 8
    $region9: #{tpu_custom_call.1} parent=1 // pred_fallthru
      _
    // Predicated region
    $region10: #{tpu_custom_call.1} parent=1 // pred_check
      _
    $region11: #{tpu_custom_call.1} parent=1 // pred_check_branch
      %42 = sbr.rel (0) target = $region13
    $region12: #{tpu_custom_call.1} parent=1 // pred_region
      %s44 = ssub.s32 1024, 1024
      %45 = vsyncadd [#allocation6], %s44
      %s46 = sshll.u32 [#allocation7], 4
      %s47 = int_to_ptr.vmem [resolvable:$true] %s46
      %52 = dma.hbm_to_vmem [thread:$0]  %s2, 1024, %s47, [#allocation6], 128, 128, 8
    $region13: #{tpu_custom_call.1} parent=1 // pred_fallthru
      _
    // Predicated region
    $region14: #{tpu_custom_call.1} parent=1 // pred_check
      _
    $region15: #{tpu_custom_call.1} parent=1 // pred_check_branch
      %54 = sbr.rel (0) target = $region17
    $region16: #{tpu_custom_call.1} parent=1 // pred_region
      %s56 = ssub.s32 512, 512
      %57 = vsyncadd [#allocation9], %s56
      %s58 = sshll.u32 [#allocation8], 4
      %s59 = int_to_ptr.vmem [resolvable:$true] %s58
      %64 = dma.hbm_to_vmem [thread:$0]  %s3, 512, %s59, [#allocation9], 128, 128, 8
    $region17: #{tpu_custom_call.1} parent=1 // pred_fallthru
      _
    // Predicated region
    $region18: #{tpu_custom_call.1} parent=1 // pred_check
      _
    $region19: #{tpu_custom_call.1} parent=1 // pred_check_branch
      %66 = sbr.rel (0) target = $region21
    $region20: #{tpu_custom_call.1} parent=1 // pred_region
      %s68 = ssub.s32 16, 16
      %69 = vsyncadd [#allocation9], %s68
      %s71 = sshll.u32 [#allocation10], 4
      %s72 = int_to_ptr.vmem [resolvable:$true] %s71
      %74 = dma.hbm_to_vmem [thread:$0]  %s4, 16, %s72, [#allocation9]
    $region21: #{tpu_custom_call.1} parent=1 // pred_fallthru
      _
    // Predicated region
    $region22: #{tpu_custom_call.1} parent=1 // pred_check
      _
    $region23: #{tpu_custom_call.1} parent=1 // pred_check_branch
      %76 = sbr.rel (0) target = $region25
    $region24: #{tpu_custom_call.1} parent=1 // pred_region
      %s78 = ssub.s32 16, 16
      %79 = vsyncadd [#allocation12], %s78
      %s81 = sshll.u32 [#allocation11], 4
      %s82 = int_to_ptr.vmem [resolvable:$true] %s81
      %84 = dma.hbm_to_vmem [thread:$0]  %s5, 16, %s82, [#allocation12]
    $region25: #{tpu_custom_call.1} parent=1 // pred_fallthru
      _
    // Predicated region
    $region26: #{tpu_custom_call.1} parent=1 // pred_check
      _
    $region27: #{tpu_custom_call.1} parent=1 // pred_check_branch
      %86 = sbr.rel (0) target = $region29
    $region28: #{tpu_custom_call.1} parent=1 // pred_region
      %87 = dma.done [#allocation3], 128
    $region29: #{tpu_custom_call.1} parent=1 // pred_fallthru
      _
    // Predicated region
    $region30: #{tpu_custom_call.1} parent=1 // pred_check
      _
    $region31: #{tpu_custom_call.1} parent=1 // pred_check_branch
      %89 = sbr.rel (0) target = $region33
    $region32: #{tpu_custom_call.1} parent=1 // pred_region
      %90 = dma.done [#allocation6], 1024
    $region33: #{tpu_custom_call.1} parent=1 // pred_fallthru
      _
    // Predicated region
    $region34: #{tpu_custom_call.1} parent=1 // pred_check
      _
    $region35: #{tpu_custom_call.1} parent=1 // pred_check_branch
      %92 = sbr.rel (0) target = $region37
    $region36: #{tpu_custom_call.1} parent=1 // pred_region
      %93 = dma.done [#allocation6], 1024
    $region37: #{tpu_custom_call.1} parent=1 // pred_fallthru
      _
    // Predicated region
    $region38: #{tpu_custom_call.1} parent=1 // pred_check
      _
    $region39: #{tpu_custom_call.1} parent=1 // pred_check_branch
      %95 = sbr.rel (0) target = $region41
    $region40: #{tpu_custom_call.1} parent=1 // pred_region
      %96 = dma.done [#allocation9], 512
    $region41: #{tpu_custom_call.1} parent=1 // pred_fallthru
      _
    // Predicated region
    $region42: #{tpu_custom_call.1} parent=1 // pred_check
      _
    $region43: #{tpu_custom_call.1} parent=1 // pred_check_branch
      %98 = sbr.rel (0) target = $region45
    $region44: #{tpu_custom_call.1} parent=1 // pred_region
      %99 = dma.done [#allocation9], 16
    $region45: #{tpu_custom_call.1} parent=1 // pred_fallthru
      _
    // Predicated region
    $region46: #{tpu_custom_call.1} parent=1 // pred_check
      _
    $region47: #{tpu_custom_call.1} parent=1 // pred_check_branch
      %101 = sbr.rel (0) target = $region49
    $region48: #{tpu_custom_call.1} parent=1 // pred_region
      %102 = dma.done [#allocation12], 16
    $region49: #{tpu_custom_call.1} parent=1 // pred_fallthru
      _
    %v103 = vld [vmem:[#allocation5] sm:$0xff]
    %v104 = vld [vmem:[#allocation5 + $0x8] sm:$0xff]
    %v105 = vld [vmem:[#allocation5 + $0x10] sm:$0xff]
    %v106 = vld [vmem:[#allocation5 + $0x18] sm:$0xff]
    %v107 = vld [vmem:[#allocation5 + $0x20] sm:$0xff]
    %v108 = vld [vmem:[#allocation5 + $0x28] sm:$0xff]
    %v109 = vld [vmem:[#allocation5 + $0x30] sm:$0xff]
    %v110 = vld [vmem:[#allocation5 + $0x38] sm:$0xff]
    %v111 = vld [vmem:[#allocation8] sm:$0xff]
    %v112 = vld [vmem:[#allocation8 + $0x8] sm:$0xff]
    %v113 = vld [vmem:[#allocation8 + $0x10] sm:$0xff]
    %v114 = vld [vmem:[#allocation8 + $0x18] sm:$0xff]
    %v115 = vld [vmem:[#allocation10] sm:$0x1]
    %v117 = vlaneseq
    %v118 = vshrl.u32 %v117, 7
    %v119 = vsub.s32 0, %v118
    %v120 = vrot.slane %v115, %v119
    %vm122 = vcmask 261120
    %v124 = vsel %vm122, %v103, 0
    %v127 = vsel %vm122, %v104, 0
    %v130 = vsel %vm122, %v105, 0
    %v133 = vsel %vm122, %v106, 0
    %v136 = vsel %vm122, %v107, 0
    %v139 = vsel %vm122, %v108, 0
    %v142 = vsel %vm122, %v109, 0
    %v145 = vsel %vm122, %v110, 0
    %147 = vmatprep.subr.mxu0 0.0
    %148 = vmatpush1.msra.mxu0 %v111
    %149 = vmatprep.subr.mxu0 0.0
    %150 = vmatpush1.msra.mxu0 %v112
    %151 = vmatprep.subr.mxu0 0.0
    %152 = vmatpush1.msra.mxu0 %v113
    %153 = vmatprep.subr.mxu0 0.0
    %154 = vmatpush1.msra.mxu0 %v114
    %155 = vmatprep.subr.mxu0 0.0
    %156 = vmatpush1.msra.mxu0 0.0
    %157 = vmatprep.subr.mxu0 0.0
    %158 = vmatpush1.msra.mxu0 0.0
    %159 = vmatprep.subr.mxu0 0.0
    %160 = vmatpush1.msra.mxu0 0.0
    %161 = vmatprep.subr.mxu0 0.0
    %162 = vmatpush1.msra.mxu0 0.0
    %163 = vmatprep.subr.mxu0 0.0
    %164 = vmatpush1.msra.mxu0 0.0
    %165 = vmatprep.subr.mxu0 0.0
    %166 = vmatpush1.msra.mxu0 0.0
    %167 = vmatprep.subr.mxu0 0.0
    %168 = vmatpush1.msra.mxu0 0.0
    %169 = vmatprep.subr.mxu0 0.0
    %170 = vmatpush1.msra.mxu0 0.0
    %171 = vmatprep.subr.mxu0 0.0
    %172 = vmatpush1.msra.mxu0 0.0
    %173 = vmatprep.subr.mxu0 0.0
    %174 = vmatpush1.msra.mxu0 0.0
    %175 = vmatprep.subr.mxu0 0.0
    %176 = vmatpush1.msra.mxu0 0.0
    %177 = vmatprep.subr.mxu0 0.0
    %178 = vmatpush1.msra.mxu0 0.0
    %179 = vmatprep.subr.mxu0 0.0
    %180 = vmatpush1.msra.mxu0 0.0
    %181 = vmatprep.subr.mxu0 0.0
    %182 = vmatpush1.msra.mxu0 0.0
    %183 = vmatprep.subr.mxu0 0.0
    %184 = vmatpush1.msra.mxu0 0.0
    %185 = vmatprep.subr.mxu0 0.0
    %186 = vmatpush1.msra.mxu0 0.0
    %187 = vmatprep.subr.mxu0 0.0
    %188 = vmatpush1.msra.mxu0 0.0
    %189 = vmatprep.subr.mxu0 0.0
    %190 = vmatpush1.msra.mxu0 0.0
    %191 = vmatprep.subr.mxu0 0.0
    %192 = vmatpush1.msra.mxu0 0.0
    %193 = vmatprep.subr.mxu0 0.0
    %194 = vmatpush1.msra.mxu0 0.0
    %195 = vmatprep.subr.mxu0 0.0
    %196 = vmatpush1.msra.mxu0 0.0
    %197 = vmatprep.subr.mxu0 0.0
    %198 = vmatpush1.msra.mxu0 0.0
    %199 = vmatprep.subr.mxu0 0.0
    %200 = vmatpush1.msra.mxu0 0.0
    %201 = vmatprep.subr.mxu0 0.0
    %202 = vmatpush1.msra.mxu0 0.0
    %203 = vmatprep.subr.mxu0 0.0
    %204 = vmatpush1.msra.mxu0 0.0
    %205 = vmatprep.subr.mxu0 0.0
    %206 = vmatpush1.msra.mxu0 0.0
    %207 = vmatprep.subr.mxu0 0.0
    %208 = vmatpush1.msra.mxu0 0.0
    %209 = vmatprep.subr.mxu0 0.0
    %210 = vmatpush1.msra.mxu0 0.0
    %211 = vmatprep.mubr.f32.mxu0 0.0
    %212 = vmatmul.mubr.f32.gmra.mrb[0].mxu0 %v124
    %v213 = vpop.f32.mrb[0].mxu0
    %v214 = vadd.f32 %v120, %v213
    %v215 = vpop.f32.mrb[0].mxu0
    %216 = vmatprep.mubr.f32.mxu0 0.0
    %217 = vmatmul.mubr.f32.gmra.mrb[0].mxu0 %v127
    %v218 = vpop.f32.mrb[0].mxu0
    %v219 = vadd.f32 %v120, %v218
    %v220 = vpop.f32.mrb[0].mxu0
    %221 = vmatprep.mubr.f32.mxu0 0.0
    %222 = vmatmul.mubr.f32.gmra.mrb[0].mxu0 %v130
    %v223 = vpop.f32.mrb[0].mxu0
    %v224 = vadd.f32 %v120, %v223
    %v225 = vpop.f32.mrb[0].mxu0
    %226 = vmatprep.mubr.f32.mxu0 0.0
    %227 = vmatmul.mubr.f32.gmra.mrb[0].mxu0 %v133
    %v228 = vpop.f32.mrb[0].mxu0
    %v229 = vadd.f32 %v120, %v228
    %v230 = vpop.f32.mrb[0].mxu0
    %231 = vmatprep.mubr.f32.mxu0 0.0
    %232 = vmatmul.mubr.f32.gmra.mrb[0].mxu0 %v136
    %v233 = vpop.f32.mrb[0].mxu0
    %v234 = vadd.f32 %v120, %v233
    %v235 = vpop.f32.mrb[0].mxu0
    %236 = vmatprep.mubr.f32.mxu0 0.0
    %237 = vmatmul.mubr.f32.gmra.mrb[0].mxu0 %v139
    %v238 = vpop.f32.mrb[0].mxu0
    %v239 = vadd.f32 %v120, %v238
    %v240 = vpop.f32.mrb[0].mxu0
    %241 = vmatprep.mubr.f32.mxu0 0.0
    %242 = vmatmul.mubr.f32.gmra.mrb[0].mxu0 %v142
    %v243 = vpop.f32.mrb[0].mxu0
    %v244 = vadd.f32 %v120, %v243
    %v245 = vpop.f32.mrb[0].mxu0
    %246 = vmatprep.mubr.f32.mxu0 0.0
    %247 = vmatmul.mubr.f32.gmra.mrb[0].mxu0 %v145
    %v248 = vpop.f32.mrb[0].mxu0
    %v249 = vadd.f32 %v120, %v248
    %v250 = vpop.f32.mrb[0].mxu0
    %251 = vdwg.mxu0
    %v252 = vtanh.pop %v214
    %v253 = vtanh.pop %v219
    %v254 = vtanh.pop %v224
    %v255 = vtanh.pop %v229
    %v256 = vtanh.pop %v234
    %v257 = vtanh.pop %v239
    %v258 = vtanh.pop %v244
    %v259 = vtanh.pop %v249
    %v260 = vld [vmem:[#allocation11] sm:$0x1]
    %v262 = vlaneseq
    %v263 = vshrl.u32 %v262, 7
    %v264 = vsub.s32 0, %v263
    %v265 = vrot.slane %v260, %v264
    %v267 = vmul.f32 %v252, %v265
    %v268 = vmul.f32 %v253, %v265
    %v269 = vmul.f32 %v254, %v265
    %v270 = vmul.f32 %v255, %v265
    %v271 = vmul.f32 %v256, %v265
    %v272 = vmul.f32 %v257, %v265
    %v273 = vmul.f32 %v258, %v265
    %v274 = vmul.f32 %v259, %v265
    %vm275 = vcmask 130048
    %v276 = vsel %vm275, %v267, 0.0
    %277 = vadd.xlane.f32.xlu0 %v276
    %v278 = vpop.xlane.xlu0 %277
    %v279 = vsel %vm275, %v268, 0.0
    %280 = vadd.xlane.f32.xlu0 %v279
    %v281 = vpop.xlane.xlu0 %280
    %v282 = vsel %vm275, %v269, 0.0
    %283 = vadd.xlane.f32.xlu0 %v282
    %v284 = vpop.xlane.xlu0 %283
    %v285 = vsel %vm275, %v270, 0.0
    %286 = vadd.xlane.f32.xlu0 %v285
    %v287 = vpop.xlane.xlu0 %286
    %v288 = vsel %vm275, %v271, 0.0
    %289 = vadd.xlane.f32.xlu0 %v288
    %v290 = vpop.xlane.xlu0 %289
    %v291 = vsel %vm275, %v272, 0.0
    %292 = vadd.xlane.f32.xlu0 %v291
    %v293 = vpop.xlane.xlu0 %292
    %v294 = vsel %vm275, %v273, 0.0
    %295 = vadd.xlane.f32.xlu0 %v294
    %v296 = vpop.xlane.xlu0 %295
    %v297 = vsel %vm275, %v274, 0.0
    %298 = vadd.xlane.f32.xlu0 %v297
    %v299 = vpop.xlane.xlu0 %298
    %v300 = vld [vmem:[#allocation2] sm:$0xff]
    %v301 = vlaneseq
    %v302 = vand.u32 %v301, 127
    %303 = vset.pattern.permute.xlu0 0
    %304 = vperm.xlu0 %303, %v300
    %v305 = vpop.permute.xlu0 %304
    %vm306 = vcmp.lt.s32.totalorder %v302, %v305
    %v315 = vlaneseq
    %v316 = vshrl.u32 %v315, 7
    %v317 = vsub.s32 %v302, %v316
    %v318 = vrot.slane %v278, %v317
    %v319 = vlaneseq
    %v320 = vshrl.u32 %v319, 7
    %v321 = vsub.s32 %v302, %v320
    %v322 = vrot.slane %v281, %v321
    %v323 = vlaneseq
    %v324 = vshrl.u32 %v323, 7
    %v325 = vsub.s32 %v302, %v324
    %v326 = vrot.slane %v284, %v325
    %v327 = vlaneseq
    %v328 = vshrl.u32 %v327, 7
    %v329 = vsub.s32 %v302, %v328
    %v330 = vrot.slane %v287, %v329
    %v331 = vlaneseq
    %v332 = vshrl.u32 %v331, 7
    %v333 = vsub.s32 %v302, %v332
    %v334 = vrot.slane %v290, %v333
    %v335 = vlaneseq
    %v336 = vshrl.u32 %v335, 7
    %v337 = vsub.s32 %v302, %v336
    %v338 = vrot.slane %v293, %v337
    %v339 = vlaneseq
    %v340 = vshrl.u32 %v339, 7
    %v341 = vsub.s32 %v302, %v340
    %v342 = vrot.slane %v296, %v341
    %v343 = vlaneseq
    %v344 = vshrl.u32 %v343, 7
    %v345 = vsub.s32 %v302, %v344
    %v346 = vrot.slane %v299, %v345
    %vm347 = vcmask 1041409
    %v348 = vsel %vm347, %v322, %v318
    %vm349 = vcmask 1042434
    %v350 = vsel %vm349, %v326, %v348
    %vm351 = vcmask 1043459
    %v352 = vsel %vm351, %v330, %v350
    %vm353 = vcmask 1044484
    %v354 = vsel %vm353, %v334, %v352
    %vm355 = vcmask 1045509
    %v356 = vsel %vm355, %v338, %v354
    %vm357 = vcmask 1046534
    %v358 = vsel %vm357, %v342, %v356
    %vm359 = vcmask 1047559
    %v360 = vsel %vm359, %v346, %v358
    %v362 = vsel %vm306, %v360, -inf
    %vm363 = vcmask 64512
    %v364 = vsel %vm363, %v362, -inf
    %365 = vmax.xlane.f32.xlu0 %v364
    %v366 = vpop.xlane.xlu0 %365
    %v367 = vmax.f32 %v366, 0.0
    %v369 = vlaneseq
    %v370 = vshrl.u32 %v369, 7
    %v371 = vsub.s32 0, %v370
    %v372 = vrot.slane %v367, %v371
    %v373 = vlaneseq
    %v374 = vshrl.u32 %v373, 7
    %v375 = vsub.s32 1, %v374
    %v376 = vrot.slane %v367, %v375
    %v377 = vlaneseq
    %v378 = vshrl.u32 %v377, 7
    %v379 = vsub.s32 2, %v378
    %v380 = vrot.slane %v367, %v379
    %v381 = vlaneseq
    %v382 = vshrl.u32 %v381, 7
    %v383 = vsub.s32 3, %v382
    %v384 = vrot.slane %v367, %v383
    %v385 = vlaneseq
    %v386 = vshrl.u32 %v385, 7
    %v387 = vsub.s32 4, %v386
    %v388 = vrot.slane %v367, %v387
    %v389 = vlaneseq
    %v390 = vshrl.u32 %v389, 7
    %v391 = vsub.s32 5, %v390
    %v392 = vrot.slane %v367, %v391
    %v393 = vlaneseq
    %v394 = vshrl.u32 %v393, 7
    %v395 = vsub.s32 6, %v394
    %v396 = vrot.slane %v367, %v395
    %v397 = vlaneseq
    %v398 = vshrl.u32 %v397, 7
    %v399 = vsub.s32 7, %v398
    %v400 = vrot.slane %v367, %v399
    %v409 = vsub.f32 %v278, %v372
    %v410 = vsub.f32 %v281, %v376
    %v411 = vsub.f32 %v284, %v380
    %v412 = vsub.f32 %v287, %v384
    %v413 = vsub.f32 %v290, %v388
    %v414 = vsub.f32 %v293, %v392
    %v415 = vsub.f32 %v296, %v396
    %v416 = vsub.f32 %v299, %v400
    %v417 = vmul.f32 %v409, 1.442695
    %v418 = vpow.pop %v417
    %v419 = vmul.f32 %v410, 1.442695
    %v420 = vpow.pop %v419
    %v421 = vmul.f32 %v411, 1.442695
    %v422 = vpow.pop %v421
    %v423 = vmul.f32 %v412, 1.442695
    %v424 = vpow.pop %v423
    %v425 = vmul.f32 %v413, 1.442695
    %v426 = vpow.pop %v425
    %v427 = vmul.f32 %v414, 1.442695
    %v428 = vpow.pop %v427
    %v429 = vmul.f32 %v415, 1.442695
    %v430 = vpow.pop %v429
    %v431 = vmul.f32 %v416, 1.442695
    %v432 = vpow.pop %v431
    %441 = vset.pattern.permute.xlu0 0
    %442 = vperm.xlu0 %441, %v418
    %v443 = vpop.permute.xlu0 %442
    %444 = vset.pattern.permute.xlu0 0
    %445 = vperm.xlu0 %444, %v420
    %v446 = vpop.permute.xlu0 %445
    %447 = vset.pattern.permute.xlu0 0
    %448 = vperm.xlu0 %447, %v422
    %v449 = vpop.permute.xlu0 %448
    %450 = vset.pattern.permute.xlu0 0
    %451 = vperm.xlu0 %450, %v424
    %v452 = vpop.permute.xlu0 %451
    %453 = vset.pattern.permute.xlu0 0
    %454 = vperm.xlu0 %453, %v426
    %v455 = vpop.permute.xlu0 %454
    %456 = vset.pattern.permute.xlu0 0
    %457 = vperm.xlu0 %456, %v428
    %v458 = vpop.permute.xlu0 %457
    %459 = vset.pattern.permute.xlu0 0
    %460 = vperm.xlu0 %459, %v430
    %v461 = vpop.permute.xlu0 %460
    %462 = vset.pattern.permute.xlu0 0
    %463 = vperm.xlu0 %462, %v432
    %v464 = vpop.permute.xlu0 %463
    %v465 = vlaneseq
    %v466 = vshrl.u32 %v465, 7
    %v467 = vsub.s32 %v302, %v466
    %v468 = vrot.slane %v443, %v467
    %v469 = vlaneseq
    %v470 = vshrl.u32 %v469, 7
    %v471 = vsub.s32 %v302, %v470
    %v472 = vrot.slane %v446, %v471
    %v473 = vlaneseq
    %v474 = vshrl.u32 %v473, 7
    %v475 = vsub.s32 %v302, %v474
    %v476 = vrot.slane %v449, %v475
    %v477 = vlaneseq
    %v478 = vshrl.u32 %v477, 7
    %v479 = vsub.s32 %v302, %v478
    %v480 = vrot.slane %v452, %v479
    %v481 = vlaneseq
    %v482 = vshrl.u32 %v481, 7
    %v483 = vsub.s32 %v302, %v482
    %v484 = vrot.slane %v455, %v483
    %v485 = vlaneseq
    %v486 = vshrl.u32 %v485, 7
    %v487 = vsub.s32 %v302, %v486
    %v488 = vrot.slane %v458, %v487
    %v489 = vlaneseq
    %v490 = vshrl.u32 %v489, 7
    %v491 = vsub.s32 %v302, %v490
    %v492 = vrot.slane %v461, %v491
    %v493 = vlaneseq
    %v494 = vshrl.u32 %v493, 7
    %v495 = vsub.s32 %v302, %v494
    %v496 = vrot.slane %v464, %v495
    %v497 = vsel %vm347, %v472, %v468
    %v498 = vsel %vm349, %v476, %v497
    %v499 = vsel %vm351, %v480, %v498
    %v500 = vsel %vm353, %v484, %v499
    %v501 = vsel %vm355, %v488, %v500
    %v502 = vsel %vm357, %v492, %v501
    %v503 = vsel %vm359, %v496, %v502
    %v505 = vsel %vm306, %v503, 0.0
    %v506 = vsel %vm363, %v505, 0.0
    %507 = vadd.xlane.f32.xlu0 %v506
    %v508 = vpop.xlane.xlu0 %507
    %v509 = vsub.f32 0.0, %v367
    %v510 = vmul.f32 %v509, 1.442695
    %v511 = vpow.pop %v510
    %v512 = vmul.f32 %v511, 0.0001
    %v513 = vadd.f32 %v508, %v512
    %v514 = vrcp.pop %v513
    %v515 = vmul.f32 %v505, %v514
    %516 = vst.msk [vmem:[#allocation14] sm:$0xff] %vm363, %v515
    %v517 = vld [vmem:[#allocation7] sm:$0xff]
    %v518 = vld [vmem:[#allocation7 + $0x8] sm:$0xff]
    %v519 = vld [vmem:[#allocation7 + $0x10] sm:$0xff]
    %v520 = vld [vmem:[#allocation7 + $0x18] sm:$0xff]
    %v521 = vld [vmem:[#allocation7 + $0x20] sm:$0xff]
    %v522 = vld [vmem:[#allocation7 + $0x28] sm:$0xff]
    %v523 = vld [vmem:[#allocation7 + $0x30] sm:$0xff]
    %v524 = vld [vmem:[#allocation7 + $0x38] sm:$0xff]
    %v525 = vlaneseq
    %v526 = vshrl.u32 %v525, 7
    %v527 = vsub.s32 0, %v526
    %v528 = vrot.slane %v515, %v527
    %530 = vbcast.lane.b32.xlu0 %v528, 256
    %v531 = vpop.permute.xlu0 %530
    %v532 = vlaneseq
    %v533 = vshrl.u32 %v532, 7
    %v534 = vsub.s32 1, %v533
    %v535 = vrot.slane %v515, %v534
    %537 = vbcast.lane.b32.xlu0 %v535, 256
    %v538 = vpop.permute.xlu0 %537
    %v539 = vlaneseq
    %v540 = vshrl.u32 %v539, 7
    %v541 = vsub.s32 2, %v540
    %v542 = vrot.slane %v515, %v541
    %544 = vbcast.lane.b32.xlu0 %v542, 256
    %v545 = vpop.permute.xlu0 %544
    %v546 = vlaneseq
    %v547 = vshrl.u32 %v546, 7
    %v548 = vsub.s32 3, %v547
    %v549 = vrot.slane %v515, %v548
    %551 = vbcast.lane.b32.xlu0 %v549, 256
    %v552 = vpop.permute.xlu0 %551
    %v553 = vlaneseq
    %v554 = vshrl.u32 %v553, 7
    %v555 = vsub.s32 4, %v554
    %v556 = vrot.slane %v515, %v555
    %558 = vbcast.lane.b32.xlu0 %v556, 256
    %v559 = vpop.permute.xlu0 %558
    %v560 = vlaneseq
    %v561 = vshrl.u32 %v560, 7
    %v562 = vsub.s32 5, %v561
    %v563 = vrot.slane %v515, %v562
    %565 = vbcast.lane.b32.xlu0 %v563, 256
    %v566 = vpop.permute.xlu0 %565
    %v567 = vlaneseq
    %v568 = vshrl.u32 %v567, 7
    %v569 = vsub.s32 6, %v568
    %v570 = vrot.slane %v515, %v569
    %572 = vbcast.lane.b32.xlu0 %v570, 256
    %v573 = vpop.permute.xlu0 %572
    %v574 = vlaneseq
    %v575 = vshrl.u32 %v574, 7
    %v576 = vsub.s32 7, %v575
    %v577 = vrot.slane %v515, %v576
    %579 = vbcast.lane.b32.xlu0 %v577, 256
    %v580 = vpop.permute.xlu0 %579
    %v581 = vmul.f32 %v531, %v517
    %v582 = vmul.f32 %v538, %v518
    %v583 = vmul.f32 %v545, %v519
    %v584 = vmul.f32 %v552, %v520
    %v585 = vmul.f32 %v559, %v521
    %v586 = vmul.f32 %v566, %v522
    %v587 = vmul.f32 %v573, %v523
    %v588 = vmul.f32 %v580, %v524
    %v589 = vsel %vm122, %v581, 0.0
    %v590 = vrot.slane %v589, 4
    %v591 = vadd.f32 %v589, %v590
    %v592 = vrot.slane %v591, 2
    %v593 = vadd.f32 %v591, %v592
    %v594 = vrot.slane %v593, 1
    %v595 = vadd.f32 %v593, %v594
    %v596 = vsel %vm122, %v582, 0.0
    %v597 = vrot.slane %v596, 4
    %v598 = vadd.f32 %v596, %v597
    %v599 = vrot.slane %v598, 2
    %v600 = vadd.f32 %v598, %v599
    %v601 = vrot.slane %v600, 1
    %v602 = vadd.f32 %v600, %v601
    %v603 = vsel %vm122, %v583, 0.0
    %v604 = vrot.slane %v603, 4
    %v605 = vadd.f32 %v603, %v604
    %v606 = vrot.slane %v605, 2
    %v607 = vadd.f32 %v605, %v606
    %v608 = vrot.slane %v607, 1
    %v609 = vadd.f32 %v607, %v608
    %v610 = vsel %vm122, %v584, 0.0
    %v611 = vrot.slane %v610, 4
    %v612 = vadd.f32 %v610, %v611
    %v613 = vrot.slane %v612, 2
    %v614 = vadd.f32 %v612, %v613
    %v615 = vrot.slane %v614, 1
    %v616 = vadd.f32 %v614, %v615
    %v617 = vsel %vm122, %v585, 0.0
    %v618 = vrot.slane %v617, 4
    %v619 = vadd.f32 %v617, %v618
    %v620 = vrot.slane %v619, 2
    %v621 = vadd.f32 %v619, %v620
    %v622 = vrot.slane %v621, 1
    %v623 = vadd.f32 %v621, %v622
    %v624 = vsel %vm122, %v586, 0.0
    %v625 = vrot.slane %v624, 4
    %v626 = vadd.f32 %v624, %v625
    %v627 = vrot.slane %v626, 2
    %v628 = vadd.f32 %v626, %v627
    %v629 = vrot.slane %v628, 1
    %v630 = vadd.f32 %v628, %v629
    %v631 = vsel %vm122, %v587, 0.0
    %v632 = vrot.slane %v631, 4
    %v633 = vadd.f32 %v631, %v632
    %v634 = vrot.slane %v633, 2
    %v635 = vadd.f32 %v633, %v634
    %v636 = vrot.slane %v635, 1
    %v637 = vadd.f32 %v635, %v636
    %v638 = vsel %vm122, %v588, 0.0
    %v639 = vrot.slane %v638, 4
    %v640 = vadd.f32 %v638, %v639
    %v641 = vrot.slane %v640, 2
    %v642 = vadd.f32 %v640, %v641
    %v643 = vrot.slane %v642, 1
    %v644 = vadd.f32 %v642, %v643
    %v653 = vsel %vm347, %v602, %v595
    %v654 = vsel %vm349, %v609, %v653
    %v655 = vsel %vm351, %v616, %v654
    %v656 = vsel %vm353, %v623, %v655
    %v657 = vsel %vm355, %v630, %v656
    %v658 = vsel %vm357, %v637, %v657
    %v659 = vsel %vm359, %v644, %v658
    %661 = vst.msk [vmem:[#allocation13] sm:$0xff] %vm122, %v659
    // Predicated region
    $region50: #{tpu_custom_call.1} parent=1 // pred_check
      _
    $region51: #{tpu_custom_call.1} parent=1 // pred_check_branch
      %663 = sbr.rel (0) target = $region53
    $region52: #{tpu_custom_call.1} parent=1 // pred_region
      %s665 = ssub.s32 128, 128
      %666 = vsyncadd [#allocation4], %s665
      %s668 = sshll.u32 [#allocation13], 4
      %s669 = int_to_ptr.vmem [resolvable:$true] %s668
      %671 = dma.vmem_to_hbm [thread:$0]  %s669, 128, %s6, [#allocation4]
    $region53: #{tpu_custom_call.1} parent=1 // pred_fallthru
      _
    // Predicated region
    $region54: #{tpu_custom_call.1} parent=1 // pred_check
      _
    $region55: #{tpu_custom_call.1} parent=1 // pred_check_branch
      %673 = sbr.rel (0) target = $region57
    $region56: #{tpu_custom_call.1} parent=1 // pred_region
      %s675 = ssub.s32 128, 128
      %676 = vsyncadd [#allocation15], %s675
      %s678 = sshll.u32 [#allocation14], 4
      %s679 = int_to_ptr.vmem [resolvable:$true] %s678
      %681 = dma.vmem_to_hbm [thread:$0]  %s679, 128, %s7, [#allocation15]
    $region57: #{tpu_custom_call.1} parent=1 // pred_fallthru
      _
    // Predicated region
    $region58: #{tpu_custom_call.1} parent=1 // pred_check
      _
    $region59: #{tpu_custom_call.1} parent=1 // pred_check_branch
      %683 = sbr.rel (0) target = $region61
    $region60: #{tpu_custom_call.1} parent=1 // pred_region
      %684 = dma.done [#allocation4], 128
    $region61: #{tpu_custom_call.1} parent=1 // pred_fallthru
      _
    // Predicated region
    $region62: #{tpu_custom_call.1} parent=1 // pred_check
      _
    $region63: #{tpu_custom_call.1} parent=1 // pred_check_branch
      %686 = sbr.rel (0) target = $region65
    $region64: #{tpu_custom_call.1} parent=1 // pred_region
      %687 = dma.done [#allocation15], 128
    $region65: #{tpu_custom_call.1} parent=1 // pred_fallthru
      _
    %688 = vsyncpa [#allocation3], 1
    %689 = vsyncpa [#allocation6], 1
    %690 = vsyncpa [#allocation9], 1
    %691 = vsyncpa [#allocation12], 1
    %692 = vsyncpa [#allocation4], 1
    %693 = vsyncpa [#allocation15], 1

</llo_original>
